<compile_context>
chip_gen: v6e
topology: v6e:2x2x1
jax: 0.10.0
libtpu: 0.0.40
codegen_flags: <defaults>
</compile_context>

<pallas_src>
import functools

import jax
import jax.numpy as jnp
from jax.experimental import pallas as pl
from jax.experimental.pallas import tpu as pltpu

# Model dims (from the PyTorch module) and padded/packed layout constants.
IN_DIM, HID, LAT = 51, 100, 32
IN_PAD = 64            # y padded 51 -> 64 lanes (zero cols -> exact math)
LANE = 128             # all packed slabs are 128 lanes wide
# Row offsets of each weight segment inside the packed (W_ROWS, 128) weight slab.
W1_OFF, W1_ROWS = 0, 64      # fc1:  (51,100)  padded to (64,128)
W2_OFF, W2_ROWS = 64, 128    # fc21||fc22: (100,64) padded to (128,128)
W3_OFF, W3_ROWS = 192, 32    # fc3:  (32,100)  padded to (32,128)
W4_OFF, W4_ROWS = 224, 128   # fc4:  (100,51)  padded to (128,128)
W_ROWS = 352
B_ROWS = 8                   # bias slab rows (b1,b2,b3,b4,zero-pad)


def _round_up(x, m):
    return (x + m - 1) // m * m


def scan_forward_kernel(y_ref, eps_ref, wp_ref, bp_ref, slab_ref):
    """One batch tile of the full SCAN forward. All operands VMEM-resident."""
    cdt = wp_ref.dtype                       # bf16 compute dtype for MXU operands
    y = y_ref[...]                           # (TB, 64)  f32, cols 51.. are zero
    eps = eps_ref[...]                       # (TB, 32)  f32

    # Static, tile-aligned views into the packed parameter slabs.
    w1 = wp_ref[W1_OFF:W1_OFF + W1_ROWS, :]  # (64, 128)
    w2 = wp_ref[W2_OFF:W2_OFF + W2_ROWS, :]  # (128, 128)  [w21|w22|0]
    w3 = wp_ref[W3_OFF:W3_OFF + W3_ROWS, :]  # (32, 128)
    w4 = wp_ref[W4_OFF:W4_OFF + W4_ROWS, :]  # (128, 128)
    bp = bp_ref[...]                         # (8, 128) f32
    b1, b2, b3, b4 = bp[0:1, :], bp[1:2, :], bp[2:3, :], bp[3:4, :]

    # encode: h = relu(y @ W1 + b1)          -> (TB,128); padded cols are exactly 0
    h = jnp.dot(y.astype(cdt), w1, preferred_element_type=jnp.float32) + b1
    h = jnp.maximum(h, 0.0)

    # fused heads: muv = h @ [W21|W22] + [b21|b22] -> (TB,128): [mu(32)|logvar(32)|0...]
    muv = jnp.dot(h.astype(cdt), w2, preferred_element_type=jnp.float32) + b2
    mu = muv[:, 0:LAT]
    logvar = muv[:, LAT:2 * LAT]

    # reparameterize: z = eps * exp(0.5*logvar) + mu
    z = eps * jnp.exp(0.5 * logvar) + mu     # (TB, 32)

    # decode: x = relu(z @ W3 + b3); logits = x @ W4 + b4
    x = jnp.dot(z.astype(cdt), w3, preferred_element_type=jnp.float32) + b3
    x = jnp.maximum(x, 0.0)
    logits = jnp.dot(x.astype(cdt), w4, preferred_element_type=jnp.float32) + b4

    # stable sigmoid on EUP: exp + approximate reciprocal (no inf intermediate)
    e = jnp.exp(-jnp.abs(logits))
    p = pl.reciprocal(1.0 + e, approx=True)
    sig = jnp.where(logits >= 0.0, p, 1.0 - p)      # (TB,128); cols >=51 are dummy 0.5

    # lane-dense output slab: [out(51) | pad(13) | mu(32) | logvar(32)]
    slab_ref[...] = jnp.concatenate([sig[:, 0:IN_PAD], muv[:, 0:2 * LAT]], axis=1)

    # TODO(synk): optionally fuse the BCE + KL loss reductions here (per-row scalars appended
    # to the output slab) to avoid a second launch when training.


def pack_params(params, compute_dtype=jnp.bfloat16):
    """Pack all weights into one (352,128) slab and all biases into one (8,128) slab."""
    def pad2(a, rows, cols):
        return jnp.pad(a, ((0, rows - a.shape[0]), (0, cols - a.shape[1])))

    w2_fused = jnp.concatenate([params["w21"], params["w22"]], axis=1)   # (100, 64)
    wp = jnp.concatenate([
        pad2(params["w1"], W1_ROWS, LANE),
        pad2(w2_fused, W2_ROWS, LANE),
        pad2(params["w3"], W3_ROWS, LANE),
        pad2(params["w4"], W4_ROWS, LANE),
    ], axis=0).astype(compute_dtype)                                     # (352, 128)

    b2_fused = jnp.concatenate([params["b21"], params["b22"]], axis=1)   # (1, 64)
    bp = jnp.concatenate([
        pad2(params["b1"], 1, LANE),
        pad2(b2_fused, 1, LANE),
        pad2(params["b3"], 1, LANE),
        pad2(params["b4"], 1, LANE),
        jnp.zeros((B_ROWS - 4, LANE), jnp.float32),
    ], axis=0)                                                           # (8, 128)
    return wp, bp


def scan_forward(y, eps, params, *, compute_dtype=jnp.bfloat16, max_tile=256):
    """Wrapper: pack params, pad y/eps, run the batch-tiled kernel, slice the output slab."""
    B = y.shape[0]
    wp, bp = pack_params(params, compute_dtype)

    TB = max_tile if B >= max_tile else _round_up(B, 8)
    Bp = _round_up(B, TB)
    yp = jnp.pad(y, ((0, Bp - B), (0, IN_PAD - IN_DIM)))    # (Bp, 64)
    ep = jnp.pad(eps, ((0, Bp - B), (0, 0)))                # (Bp, 32)

    slab = pl.pallas_call(
        scan_forward_kernel,
        out_shape=jax.ShapeDtypeStruct((Bp, LANE), jnp.float32),
        grid_spec=pltpu.PrefetchScalarGridSpec(
            num_scalar_prefetch=0,
            grid=(Bp // TB,),
            in_specs=[
                pl.BlockSpec((TB, IN_PAD), lambda i: (i, 0)),    # y tile
                pl.BlockSpec((TB, LAT), lambda i: (i, 0)),       # eps tile
                pl.BlockSpec((W_ROWS, LANE), lambda i: (0, 0)),  # weights: VMEM-resident
                pl.BlockSpec((B_ROWS, LANE), lambda i: (0, 0)),  # biases:  VMEM-resident
            ],
            out_specs=pl.BlockSpec((TB, LANE), lambda i: (i, 0)),
        ),
        compiler_params=pltpu.CompilerParams(
            dimension_semantics=("parallel",)),
    )(yp, ep, wp, bp)

    out = slab[:B, 0:IN_DIM]
    mu = slab[:B, IN_PAD:IN_PAD + LAT]
    logvar = slab[:B, IN_PAD + LAT:IN_PAD + 2 * LAT]
    return out, mu, logvar


def init_params(key):
    """Deterministic init mimicking PyTorch nn.Linear default (uniform +-1/sqrt(fan_in))."""
    def linear(key, fan_in, fan_out):
        kw, kb = jax.random.split(key)
        bound = 1.0 / jnp.sqrt(fan_in)
        w = jax.random.uniform(kw, (fan_in, fan_out), jnp.float32, -bound, bound)
        b = jax.random.uniform(kb, (1, fan_out), jnp.float32, -bound, bound)
        return w, b

    k1, k21, k22, k3, k4 = jax.random.split(key, 5)
    w1, b1 = linear(k1, IN_DIM, HID)
    w21, b21 = linear(k21, HID, LAT)
    w22, b22 = linear(k22, HID, LAT)
    w3, b3 = linear(k3, LAT, HID)
    w4, b4 = linear(k4, HID, IN_DIM)
    return dict(w1=w1, b1=b1, w21=w21, b21=b21, w22=w22, b22=b22,
                w3=w3, b3=b3, w4=w4, b4=b4)


def reference_forward_f32(y, eps, p):
    """Pure f32 JAX reference (exact PyTorch forward semantics)."""
    h = jnp.maximum(y @ p["w1"] + p["b1"], 0.0)
    mu = h @ p["w21"] + p["b21"]
    logvar = h @ p["w22"] + p["b22"]
    z = eps * jnp.exp(0.5 * logvar) + mu
    x = jnp.maximum(z @ p["w3"] + p["b3"], 0.0)
    out = jax.nn.sigmoid(x @ p["w4"] + p["b4"])
    return out, mu, logvar


def reference_forward_matched(y, eps, p, dt=jnp.bfloat16):
    """Reference mirroring kernel numerics (bf16 matmul operands, f32 accumulation)."""
    def mm(a, w):
        return jnp.dot(a.astype(dt), w.astype(dt), preferred_element_type=jnp.float32)
    h = jnp.maximum(mm(y, p["w1"]) + p["b1"], 0.0)
    mu = mm(h, p["w21"]) + p["b21"]
    logvar = mm(h, p["w22"]) + p["b22"]
    z = eps * jnp.exp(0.5 * logvar) + mu
    x = jnp.maximum(mm(z, p["w3"]) + p["b3"], 0.0)
    out = jax.nn.sigmoid(mm(x, p["w4"]) + p["b4"])
    return out, mu, logvar


def _check(y, eps, params, out, mu, logvar):
    om, mm_, lm = reference_forward_matched(y, eps, params)
    assert jnp.allclose(out, om, atol=5e-3, rtol=1e-3), "out vs matched ref mismatch"
    assert jnp.allclose(mu, mm_, atol=5e-3, rtol=1e-3), "mu vs matched ref mismatch"
    assert jnp.allclose(logvar, lm, atol=5e-3, rtol=1e-3), "logvar vs matched ref mismatch"
    of, mf, lf = reference_forward_f32(y, eps, params)
    assert jnp.allclose(out, of, atol=5e-2, rtol=5e-2), "out vs f32 ref mismatch"
    assert jnp.allclose(mu, mf, atol=5e-2, rtol=5e-2), "mu vs f32 ref mismatch"
    assert jnp.allclose(logvar, lf, atol=5e-2, rtol=5e-2), "logvar vs f32 ref mismatch"


if __name__ == "__main__":
    key = jax.random.PRNGKey(0)
    k_param, k_y, k_eps, k_y2, k_eps2 = jax.random.split(key, 5)

    params = init_params(k_param)

    # Small batch: single grid step.
    B = 8
    y = jax.random.uniform(k_y, (B, IN_DIM), jnp.float32)          # BCE-style targets in [0,1]
    eps = jax.random.normal(k_eps, (B, LAT), jnp.float32)          # reparameterization noise
    out, mu, logvar = scan_forward(y, eps, params)
    jax.block_until_ready((out, mu, logvar))
    _check(y, eps, params, out, mu, logvar)

    # Larger batch: exercises the batch grid (2 "parallel" steps) + row padding.
    B2 = 300
    y2 = jax.random.uniform(k_y2, (B2, IN_DIM), jnp.float32)
    eps2 = jax.random.normal(k_eps2, (B2, LAT), jnp.float32)
    out2, mu2, logvar2 = scan_forward(y2, eps2, params)
    jax.block_until_ready((out2, mu2, logvar2))
    _check(y2, eps2, params, out2, mu2, logvar2)

    print("KERNEL_OK")
</pallas_src>

<mosaic_0001>
module attributes {stable_mosaic.version = 11 : i64} {
  func.func @scan_forward_kernel(%arg0: i32, %arg1: memref<8x64xf32, #tpu.memory_space<vmem>>, %arg2: memref<8x32xf32, #tpu.memory_space<vmem>>, %arg3: memref<352x128xbf16, #tpu.memory_space<vmem>>, %arg4: memref<8x128xf32, #tpu.memory_space<vmem>>, %arg5: memref<8x128xf32, #tpu.memory_space<vmem>>) attributes {dimension_semantics = [#tpu.dimension_semantics<parallel>], iteration_bounds = array<i64: 1>, scalar_prefetch = 0 : i64, scratch_operands = 0 : i64, tpu.core_type = #tpu.core_type<tc>, window_params = [{transform_indices = @transform_0, window_bounds = array<i64: 8, 64>}, {transform_indices = @transform_1, window_bounds = array<i64: 8, 32>}, {pipeline_mode = #tpu.pipeline_mode<synchronous>, transform_indices = @transform_2, window_bounds = array<i64: 352, 128>}, {pipeline_mode = #tpu.pipeline_mode<synchronous>, transform_indices = @transform_3, window_bounds = array<i64: 8, 128>}, {transform_indices = @transform_4, window_bounds = array<i64: 8, 128>}]} {
    %c0 = arith.constant 0 : index
    %c0_0 = arith.constant 0 : index
    %0 = vector.load %arg1[%c0, %c0_0] : memref<8x64xf32, #tpu.memory_space<vmem>>, vector<8x64xf32>
    %c0_1 = arith.constant 0 : index
    %c0_2 = arith.constant 0 : index
    %1 = vector.load %arg2[%c0_1, %c0_2] : memref<8x32xf32, #tpu.memory_space<vmem>>, vector<8x32xf32>
    %c0_3 = arith.constant 0 : index
    %c0_4 = arith.constant 0 : index
    %2 = vector.load %arg3[%c0_3, %c0_4] : memref<352x128xbf16, #tpu.memory_space<vmem>>, vector<64x128xbf16>
    %c64 = arith.constant 64 : index
    %c0_5 = arith.constant 0 : index
    %3 = vector.load %arg3[%c64, %c0_5] : memref<352x128xbf16, #tpu.memory_space<vmem>>, vector<128x128xbf16>
    %c192 = arith.constant 192 : index
    %c0_6 = arith.constant 0 : index
    %4 = vector.load %arg3[%c192, %c0_6] : memref<352x128xbf16, #tpu.memory_space<vmem>>, vector<32x128xbf16>
    %c224 = arith.constant 224 : index
    %c0_7 = arith.constant 0 : index
    %5 = vector.load %arg3[%c224, %c0_7] : memref<352x128xbf16, #tpu.memory_space<vmem>>, vector<128x128xbf16>
    %c0_8 = arith.constant 0 : index
    %c0_9 = arith.constant 0 : index
    %6 = vector.load %arg4[%c0_8, %c0_9] : memref<8x128xf32, #tpu.memory_space<vmem>>, vector<8x128xf32>
    %7 = vector.extract_strided_slice %6 {offsets = [0, 0], sizes = [1, 128], strides = [1, 1]} : vector<8x128xf32> to vector<1x128xf32>
    %8 = vector.extract_strided_slice %6 {offsets = [1, 0], sizes = [1, 128], strides = [1, 1]} : vector<8x128xf32> to vector<1x128xf32>
    %9 = vector.extract_strided_slice %6 {offsets = [2, 0], sizes = [1, 128], strides = [1, 1]} : vector<8x128xf32> to vector<1x128xf32>
    %10 = vector.extract_strided_slice %6 {offsets = [3, 0], sizes = [1, 128], strides = [1, 1]} : vector<8x128xf32> to vector<1x128xf32>
    %11 = arith.truncf %0 : vector<8x64xf32> to vector<8x64xbf16>
    %cst = arith.constant dense<0.000000e+00> : vector<8x128xf32>
    %12 = tpu.matmul %11, %2, %cst {dimension_numbers = #tpu.dot_dimension_numbers<[1], [0], [0], [1], [0, 0, 1, 1], [], []>} : vector<8x64xbf16>, vector<64x128xbf16>, vector<8x128xf32> -> vector<8x128xf32>
    %13 = vector.broadcast %7 : vector<1x128xf32> to vector<8x128xf32>
    %14 = arith.addf %12, %13 : vector<8x128xf32>
    %cst_10 = arith.constant 0.000000e+00 : f32
    %15 = vector.broadcast %cst_10 : f32 to vector<8x128xf32>
    %16 = arith.maximumf %14, %15 : vector<8x128xf32>
    %17 = arith.truncf %16 : vector<8x128xf32> to vector<8x128xbf16>
    %cst_11 = arith.constant dense<0.000000e+00> : vector<8x128xf32>
    %18 = tpu.matmul %17, %3, %cst_11 {dimension_numbers = #tpu.dot_dimension_numbers<[1], [0], [0], [1], [0, 0, 1, 1], [], []>} : vector<8x128xbf16>, vector<128x128xbf16>, vector<8x128xf32> -> vector<8x128xf32>
    %19 = vector.broadcast %8 : vector<1x128xf32> to vector<8x128xf32>
    %20 = arith.addf %18, %19 : vector<8x128xf32>
    %21 = vector.extract_strided_slice %20 {offsets = [0, 0], sizes = [8, 32], strides = [1, 1]} : vector<8x128xf32> to vector<8x32xf32>
    %22 = vector.extract_strided_slice %20 {offsets = [0, 32], sizes = [8, 32], strides = [1, 1]} : vector<8x128xf32> to vector<8x32xf32>
    %cst_12 = arith.constant 5.000000e-01 : f32
    %23 = vector.broadcast %cst_12 : f32 to vector<8x32xf32>
    %24 = arith.mulf %23, %22 : vector<8x32xf32>
    %25 = math.exp %24 : vector<8x32xf32>
    %26 = arith.mulf %1, %25 : vector<8x32xf32>
    %27 = arith.addf %26, %21 : vector<8x32xf32>
    %28 = arith.truncf %27 : vector<8x32xf32> to vector<8x32xbf16>
    %cst_13 = arith.constant dense<0.000000e+00> : vector<8x128xf32>
    %29 = tpu.matmul %28, %4, %cst_13 {dimension_numbers = #tpu.dot_dimension_numbers<[1], [0], [0], [1], [0, 0, 1, 1], [], []>} : vector<8x32xbf16>, vector<32x128xbf16>, vector<8x128xf32> -> vector<8x128xf32>
    %30 = vector.broadcast %9 : vector<1x128xf32> to vector<8x128xf32>
    %31 = arith.addf %29, %30 : vector<8x128xf32>
    %cst_14 = arith.constant 0.000000e+00 : f32
    %32 = vector.broadcast %cst_14 : f32 to vector<8x128xf32>
    %33 = arith.maximumf %31, %32 : vector<8x128xf32>
    %34 = arith.truncf %33 : vector<8x128xf32> to vector<8x128xbf16>
    %cst_15 = arith.constant dense<0.000000e+00> : vector<8x128xf32>
    %35 = tpu.matmul %34, %5, %cst_15 {dimension_numbers = #tpu.dot_dimension_numbers<[1], [0], [0], [1], [0, 0, 1, 1], [], []>} : vector<8x128xbf16>, vector<128x128xbf16>, vector<8x128xf32> -> vector<8x128xf32>
    %36 = vector.broadcast %10 : vector<1x128xf32> to vector<8x128xf32>
    %37 = arith.addf %35, %36 : vector<8x128xf32>
    %38 = math.absf %37 : vector<8x128xf32>
    %cst_16 = arith.constant 0.000000e+00 : f32
    %39 = vector.broadcast %cst_16 : f32 to vector<8x128xf32>
    %40 = arith.subf %39, %38 : vector<8x128xf32>
    %41 = math.exp %40 : vector<8x128xf32>
    %cst_17 = arith.constant 1.000000e+00 : f32
    %42 = vector.broadcast %cst_17 : f32 to vector<8x128xf32>
    %43 = arith.addf %42, %41 : vector<8x128xf32>
    %44 = tpu.reciprocal %43 {approx = true} : vector<8x128xf32> -> vector<8x128xf32>
    %cst_18 = arith.constant 0.000000e+00 : f32
    %45 = vector.broadcast %cst_18 : f32 to vector<8x128xf32>
    %46 = arith.cmpf oge, %37, %45 : vector<8x128xf32>
    %cst_19 = arith.constant 1.000000e+00 : f32
    %47 = vector.broadcast %cst_19 : f32 to vector<8x128xf32>
    %48 = arith.subf %47, %44 : vector<8x128xf32>
    %49 = arith.select %46, %44, %48 : vector<8x128xi1>, vector<8x128xf32>
    %50 = vector.extract_strided_slice %49 {offsets = [0, 0], sizes = [8, 64], strides = [1, 1]} : vector<8x128xf32> to vector<8x64xf32>
    %51 = vector.extract_strided_slice %20 {offsets = [0, 0], sizes = [8, 64], strides = [1, 1]} : vector<8x128xf32> to vector<8x64xf32>
    %52 = tpu.concatenate %50, %51 in 1 : vector<8x64xf32>, vector<8x64xf32> -> vector<8x128xf32>
    %c0_20 = arith.constant 0 : index
    %c0_21 = arith.constant 0 : index
    %53 = vector.load %arg5[%c0_20, %c0_21] : memref<8x128xf32, #tpu.memory_space<vmem>>, vector<8x128xf32>
    tpu.vector_store %arg5[%c0_20, %c0_21], %52 {strides = array<i32>} : memref<8x128xf32, #tpu.memory_space<vmem>>, vector<8x128xf32>,
    return
  }
  func.func @transform_0(%arg0: i32) -> (i32, i32) {
    %c0_i32 = arith.constant 0 : i32
    %c0_i32_0 = arith.constant 0 : i32
    return %arg0, %c0_i32 : i32, i32
  }
  func.func @transform_1(%arg0: i32) -> (i32, i32) {
    %c0_i32 = arith.constant 0 : i32
    %c0_i32_0 = arith.constant 0 : i32
    return %arg0, %c0_i32 : i32, i32
  }
  func.func @transform_2(%arg0: i32) -> (i32, i32) {
    %c0_i32 = arith.constant 0 : i32
    %c0_i32_0 = arith.constant 0 : i32
    %c0_i32_1 = arith.constant 0 : i32
    return %c0_i32, %c0_i32_0 : i32, i32
  }
  func.func @transform_3(%arg0: i32) -> (i32, i32) {
    %c0_i32 = arith.constant 0 : i32
    %c0_i32_0 = arith.constant 0 : i32
    %c0_i32_1 = arith.constant 0 : i32
    return %c0_i32, %c0_i32_0 : i32, i32
  }
  func.func @transform_4(%arg0: i32) -> (i32, i32) {
    %c0_i32 = arith.constant 0 : i32
    %c0_i32_0 = arith.constant 0 : i32
    return %arg0, %c0_i32 : i32, i32
  }
}

</mosaic_0001>

<llo_original>
// kernel: tpu_custom_call.1
$region0: #{tpu_custom_call.1}
  #allocation0 [shape = 'u32[]', space=smem, size = 0x4, offset = 0x4, fixed_abs, tag = 'smem constant byte address 0x4 - core index']
  #allocation1 [shape = 'u32[144,128]{1,0:T(1,128)}', space=vmem, size = 0x12000, scoped, tag = 'internal scratch']
  %s0 = inlined_call_operand.hbm [shape: f32[8,64], index: 0, kind: input, shape index: {}]
  %s1 = inlined_call_operand.hbm [shape: f32[8,32], index: 1, kind: input, shape index: {}]
  %s2 = inlined_call_operand.hbm [shape: bf16[352,128], index: 2, kind: input, shape index: {}]
  %s3 = inlined_call_operand.hbm [shape: f32[8,128], index: 3, kind: input, shape index: {}]
  %s4 = inlined_call_operand.hbm [shape: f32[8,128], index: 4, kind: output, shape index: {}]
  %s5 = sld [smem:[#allocation0]]
  $region42: #{tpu_custom_call.1} parent=0
    _
  %s7 = ssub.s32 1, %s5
  %s8 = scalar_select 0, %s7, %s5
  $region1: #{tpu_custom_call.1} parent=0
    #allocation2 [shape = 'u8[4096]{0}', space=vmem, size = 0x1000, scoped, tag = 'input window, operand 0, single buffered']
    #allocation3 [shape = 's32[1]{0}', space=sflag, size = 0x4, scoped, tag = 'scoped memory for tpu_custom_call.1']
    #allocation4 [shape = 's32[1]{0}', space=sflag, size = 0x4, scoped, tag = 'scoped memory for tpu_custom_call.1']
    #allocation5 [shape = 'u8[4096]{0}', space=vmem, size = 0x1000, scoped, tag = 'input window, operand 1, single buffered']
    #allocation6 [shape = 's32[1]{0}', space=sflag, size = 0x4, scoped, tag = 'scoped memory for tpu_custom_call.1']
    #allocation7 [shape = 'u8[90112]{0}', space=vmem, size = 0x16000, scoped, tag = 'input window, operand 2, single buffered']
    #allocation8 [shape = 'u8[4096]{0}', space=vmem, size = 0x1000, scoped, tag = 'input window, operand 3, single buffered']
    #allocation9 [shape = 's32[1]{0}', space=sflag, size = 0x4, scoped, tag = 'scoped memory for tpu_custom_call.1']
    #allocation10 [shape = 'u8[4096]{0}', space=vmem, size = 0x1000, scoped, tag = 'output window, operand 0, single buffered']
    %9 = vsyncpa [#allocation3], 0
    %10 = vsyncpa [#allocation6], 0
    %11 = vsyncpa [#allocation9], 0
    %12 = vsyncpa [#allocation4], 0
    // Predicated region
    $region2: #{tpu_custom_call.1} parent=1 // pred_check
      _
    $region3: #{tpu_custom_call.1} parent=1 // pred_check_branch
      %14 = sbr.rel (0) target = $region5
    $region4: #{tpu_custom_call.1} parent=1 // pred_region
      %s16 = ssub.s32 128, 128
      %17 = vsyncadd [#allocation3], %s16
      %s19 = sshll.u32 [#allocation2], 4
      %s20 = int_to_ptr.vmem [resolvable:$true] %s19
      %22 = dma.hbm_to_vmem [thread:$0]  %s0, 128, %s20, [#allocation3]
    $region5: #{tpu_custom_call.1} parent=1 // pred_fallthru
      _
    // Predicated region
    $region6: #{tpu_custom_call.1} parent=1 // pred_check
      _
    $region7: #{tpu_custom_call.1} parent=1 // pred_check_branch
      %24 = sbr.rel (0) target = $region9
    $region8: #{tpu_custom_call.1} parent=1 // pred_region
      %s26 = ssub.s32 128, 128
      %27 = vsyncadd [#allocation6], %s26
      %s29 = sshll.u32 [#allocation5], 4
      %s30 = int_to_ptr.vmem [resolvable:$true] %s29
      %32 = dma.hbm_to_vmem [thread:$0]  %s1, 128, %s30, [#allocation6]
    $region9: #{tpu_custom_call.1} parent=1 // pred_fallthru
      _
    // Predicated region
    $region10: #{tpu_custom_call.1} parent=1 // pred_check
      _
    $region11: #{tpu_custom_call.1} parent=1 // pred_check_branch
      %34 = sbr.rel (0) target = $region13
    $region12: #{tpu_custom_call.1} parent=1 // pred_region
      %s36 = ssub.s32 2816, 2816
      %37 = vsyncadd [#allocation6], %s36
      %s38 = sshll.u32 [#allocation7], 4
      %s39 = int_to_ptr.vmem [resolvable:$true] %s38
      %44 = dma.hbm_to_vmem [thread:$0]  %s2, 2816, %s39, [#allocation6], 64, 64, 4
    $region13: #{tpu_custom_call.1} parent=1 // pred_fallthru
      _
    // Predicated region
    $region14: #{tpu_custom_call.1} parent=1 // pred_check
      _
    $region15: #{tpu_custom_call.1} parent=1 // pred_check_branch
      %46 = sbr.rel (0) target = $region17
    $region16: #{tpu_custom_call.1} parent=1 // pred_region
      %s48 = ssub.s32 128, 128
      %49 = vsyncadd [#allocation9], %s48
      %s51 = sshll.u32 [#allocation8], 4
      %s52 = int_to_ptr.vmem [resolvable:$true] %s51
      %54 = dma.hbm_to_vmem [thread:$0]  %s3, 128, %s52, [#allocation9]
    $region17: #{tpu_custom_call.1} parent=1 // pred_fallthru
      _
    // Predicated region
    $region18: #{tpu_custom_call.1} parent=1 // pred_check
      _
    $region19: #{tpu_custom_call.1} parent=1 // pred_check_branch
      %56 = sbr.rel (0) target = $region21
    $region20: #{tpu_custom_call.1} parent=1 // pred_region
      %57 = dma.done [#allocation3], 128
    $region21: #{tpu_custom_call.1} parent=1 // pred_fallthru
      _
    // Predicated region
    $region22: #{tpu_custom_call.1} parent=1 // pred_check
      _
    $region23: #{tpu_custom_call.1} parent=1 // pred_check_branch
      %59 = sbr.rel (0) target = $region25
    $region24: #{tpu_custom_call.1} parent=1 // pred_region
      %60 = dma.done [#allocation6], 128
    $region25: #{tpu_custom_call.1} parent=1 // pred_fallthru
      _
    // Predicated region
    $region26: #{tpu_custom_call.1} parent=1 // pred_check
      _
    $region27: #{tpu_custom_call.1} parent=1 // pred_check_branch
      %62 = sbr.rel (0) target = $region29
    $region28: #{tpu_custom_call.1} parent=1 // pred_region
      %63 = dma.done [#allocation6], 2816
    $region29: #{tpu_custom_call.1} parent=1 // pred_fallthru
      _
    // Predicated region
    $region30: #{tpu_custom_call.1} parent=1 // pred_check
      _
    $region31: #{tpu_custom_call.1} parent=1 // pred_check_branch
      %65 = sbr.rel (0) target = $region33
    $region32: #{tpu_custom_call.1} parent=1 // pred_region
      %66 = dma.done [#allocation9], 128
    $region33: #{tpu_custom_call.1} parent=1 // pred_fallthru
      _
    %v68 = vld [vmem:[#allocation2] sm:$0xff]
    %v69 = vld [vmem:[#allocation5] sm:$0xff]
    %v70 = vld [vmem:[#allocation7] sm:$0xf]
    %v71 = vld [vmem:[#allocation7 + $0x4] sm:$0xf]
    %v72 = vld [vmem:[#allocation7 + $0x8] sm:$0xf]
    %v73 = vld [vmem:[#allocation7 + $0xc] sm:$0xf]
    %v74 = vld [vmem:[#allocation7 + $0x10] sm:$0xf]
    %v75 = vld [vmem:[#allocation7 + $0x14] sm:$0xf]
    %v76 = vld [vmem:[#allocation7 + $0x18] sm:$0xf]
    %v77 = vld [vmem:[#allocation7 + $0x1c] sm:$0xf]
    %v78 = vld [vmem:[#allocation7 + $0x20] sm:$0xf]
    %v79 = vld [vmem:[#allocation7 + $0x24] sm:$0xf]
    %v80 = vld [vmem:[#allocation7 + $0x28] sm:$0xf]
    %v81 = vld [vmem:[#allocation7 + $0x2c] sm:$0xf]
    %v82 = vld [vmem:[#allocation7 + $0x30] sm:$0xf]
    %v83 = vld [vmem:[#allocation7 + $0x34] sm:$0xf]
    %v84 = vld [vmem:[#allocation7 + $0x38] sm:$0xf]
    %v85 = vld [vmem:[#allocation7 + $0x3c] sm:$0xf]
    %v86 = vld [vmem:[#allocation7 + $0x40] sm:$0xf]
    %v87 = vld [vmem:[#allocation7 + $0x44] sm:$0xf]
    %v88 = vld [vmem:[#allocation7 + $0x48] sm:$0xf]
    %v89 = vld [vmem:[#allocation7 + $0x4c] sm:$0xf]
    %v90 = vld [vmem:[#allocation7 + $0x50] sm:$0xf]
    %v91 = vld [vmem:[#allocation7 + $0x54] sm:$0xf]
    %v92 = vld [vmem:[#allocation7 + $0x58] sm:$0xf]
    %v93 = vld [vmem:[#allocation7 + $0x5c] sm:$0xf]
    %v94 = vld [vmem:[#allocation7 + $0x60] sm:$0xf]
    %v95 = vld [vmem:[#allocation7 + $0x64] sm:$0xf]
    %v96 = vld [vmem:[#allocation7 + $0x68] sm:$0xf]
    %v97 = vld [vmem:[#allocation7 + $0x6c] sm:$0xf]
    %v98 = vld [vmem:[#allocation7 + $0x70] sm:$0xf]
    %v99 = vld [vmem:[#allocation7 + $0x74] sm:$0xf]
    %v100 = vld [vmem:[#allocation7 + $0x78] sm:$0xf]
    %v101 = vld [vmem:[#allocation7 + $0x7c] sm:$0xf]
    %v102 = vld [vmem:[#allocation7 + $0x80] sm:$0xf]
    %v103 = vld [vmem:[#allocation7 + $0x84] sm:$0xf]
    %v104 = vld [vmem:[#allocation7 + $0x88] sm:$0xf]
    %v105 = vld [vmem:[#allocation7 + $0x8c] sm:$0xf]
    %v106 = vld [vmem:[#allocation7 + $0x90] sm:$0xf]
    %v107 = vld [vmem:[#allocation7 + $0x94] sm:$0xf]
    %v108 = vld [vmem:[#allocation7 + $0x98] sm:$0xf]
    %v109 = vld [vmem:[#allocation7 + $0x9c] sm:$0xf]
    %v110 = vld [vmem:[#allocation7 + $0xa0] sm:$0xf]
    %v111 = vld [vmem:[#allocation7 + $0xa4] sm:$0xf]
    %v112 = vld [vmem:[#allocation7 + $0xa8] sm:$0xf]
    %v113 = vld [vmem:[#allocation7 + $0xac] sm:$0xf]
    %v114 = vld [vmem:[#allocation8] sm:$0xff]
    %v115 = vpack.c.bf16 %v68, %v68
    %v116 = vlaneseq
    %v117 = vshrl.u32 %v116, 7
    %v118 = vsub.s32 0, %v117
    %v119 = vrot.slane %v114, %v118
    %v128 = vunpack.c.l.b16 %v70
    %v129 = vunpack.c.l.b16 %v71
    %v130 = vunpack.c.l.b16 %v72
    %v131 = vunpack.c.l.b16 %v73
    %v132 = vunpack.c.l.b16 %v74
    %v133 = vunpack.c.l.b16 %v75
    %v134 = vunpack.c.l.b16 %v76
    %v135 = vunpack.c.l.b16 %v77
    %v136 = vpack.c.b16 %v129, %v128
    %v137 = vpack.c.b16 %v131, %v130
    %v138 = vpack.c.b16 %v133, %v132
    %v139 = vpack.c.b16 %v135, %v134
    %vm144 = vcmask 523264
    %v146 = vsel %vm144, %v115, 0
    %148 = vmatprep.subr.bf16.mxu0 0
    %149 = vmatpush1.bf16.msra.mxu0 0
    %150 = vmatprep.subr.bf16.mxu0 0
    %151 = vmatpush1.bf16.msra.mxu0 0
    %152 = vmatprep.subr.bf16.mxu0 0
    %153 = vmatpush1.bf16.msra.mxu0 0
    %154 = vmatprep.subr.bf16.mxu0 0
    %155 = vmatpush1.bf16.msra.mxu0 0
    %156 = vmatprep.subr.bf16.mxu0 0
    %157 = vmatpush1.bf16.msra.mxu0 %v139
    %158 = vmatprep.subr.bf16.mxu0 0
    %159 = vmatpush1.bf16.msra.mxu0 %v138
    %160 = vmatprep.subr.bf16.mxu0 0
    %161 = vmatpush1.bf16.msra.mxu0 %v137
    %162 = vmatprep.subr.bf16.mxu0 0
    %163 = vmatpush1.bf16.msra.mxu0 %v136
    %164 = vmatprep.subr.bf16.mxu0 0
    %165 = vmatpush2.bf16.msra.mxu0 0
    %166 = vmatprep.subr.bf16.mxu0 0
    %167 = vmatpush2.bf16.msra.mxu0 0
    %168 = vmatprep.subr.bf16.mxu0 0
    %169 = vmatpush2.bf16.msra.mxu0 0
    %170 = vmatprep.subr.bf16.mxu0 0
    %171 = vmatpush2.bf16.msra.mxu0 0
    %172 = vmatprep.subr.bf16.mxu0 0
    %173 = vmatpush2.bf16.msra.mxu0 0
    %174 = vmatprep.subr.bf16.mxu0 0
    %175 = vmatpush2.bf16.msra.mxu0 0
    %176 = vmatprep.subr.bf16.mxu0 0
    %177 = vmatpush2.bf16.msra.mxu0 0
    %178 = vmatprep.subr.bf16.mxu0 0
    %179 = vmatpush2.bf16.msra.mxu0 0
    %180 = vmatprep.mubr.bf16.mxu0 0
    %181 = vmatmul.mubr.bf16.gmra.mxu0 %v146
    %v182 = vpop.f32.mrf.mxu0
    %v183 = vadd.f32 %v119, %v182
    %v184 = vpop.f32.mrf.mxu0
    %v185 = vpop.f32.mrf.mxu0
    %v186 = vpop.f32.mrf.mxu0
    %187 = vdwg.mxu0
    %v188 = vmax.f32 %v183, 0.0
    %v189 = vpack.c.bf16 %v188, %v188
    %v190 = vlaneseq
    %v191 = vshrl.u32 %v190, 7
    %v192 = vsub.s32 1, %v191
    %v193 = vrot.slane %v114, %v192
    %v210 = vunpack.c.l.b16 %v78
    %v211 = vunpack.c.l.b16 %v79
    %v212 = vunpack.c.l.b16 %v80
    %v213 = vunpack.c.l.b16 %v81
    %v214 = vunpack.c.l.b16 %v82
    %v215 = vunpack.c.l.b16 %v83
    %v216 = vunpack.c.l.b16 %v84
    %v217 = vunpack.c.l.b16 %v85
    %v218 = vunpack.c.l.b16 %v86
    %v219 = vunpack.c.l.b16 %v87
    %v220 = vunpack.c.l.b16 %v88
    %v221 = vunpack.c.l.b16 %v89
    %v222 = vunpack.c.l.b16 %v90
    %v223 = vunpack.c.l.b16 %v91
    %v224 = vunpack.c.l.b16 %v92
    %v225 = vunpack.c.l.b16 %v93
    %v226 = vpack.c.b16 %v211, %v210
    %v227 = vpack.c.b16 %v213, %v212
    %v228 = vpack.c.b16 %v215, %v214
    %v229 = vpack.c.b16 %v217, %v216
    %v230 = vpack.c.b16 %v219, %v218
    %v231 = vpack.c.b16 %v221, %v220
    %v232 = vpack.c.b16 %v223, %v222
    %v233 = vpack.c.b16 %v225, %v224
    %242 = vmatprep.subr.bf16.mxu0 0
    %243 = vmatpush1.bf16.msra.mxu0 %v233
    %244 = vmatprep.subr.bf16.mxu0 0
    %245 = vmatpush1.bf16.msra.mxu0 %v232
    %246 = vmatprep.subr.bf16.mxu0 0
    %247 = vmatpush1.bf16.msra.mxu0 %v231
    %248 = vmatprep.subr.bf16.mxu0 0
    %249 = vmatpush1.bf16.msra.mxu0 %v230
    %250 = vmatprep.subr.bf16.mxu0 0
    %251 = vmatpush1.bf16.msra.mxu0 %v229
    %252 = vmatprep.subr.bf16.mxu0 0
    %253 = vmatpush1.bf16.msra.mxu0 %v228
    %254 = vmatprep.subr.bf16.mxu0 0
    %255 = vmatpush1.bf16.msra.mxu0 %v227
    %256 = vmatprep.subr.bf16.mxu0 0
    %257 = vmatpush1.bf16.msra.mxu0 %v226
    %258 = vmatprep.subr.bf16.mxu0 0
    %259 = vmatpush2.bf16.msra.mxu0 0
    %260 = vmatprep.subr.bf16.mxu0 0
    %261 = vmatpush2.bf16.msra.mxu0 0
    %262 = vmatprep.subr.bf16.mxu0 0
    %263 = vmatpush2.bf16.msra.mxu0 0
    %264 = vmatprep.subr.bf16.mxu0 0
    %265 = vmatpush2.bf16.msra.mxu0 0
    %266 = vmatprep.subr.bf16.mxu0 0
    %267 = vmatpush2.bf16.msra.mxu0 0
    %268 = vmatprep.subr.bf16.mxu0 0
    %269 = vmatpush2.bf16.msra.mxu0 0
    %270 = vmatprep.subr.bf16.mxu0 0
    %271 = vmatpush2.bf16.msra.mxu0 0
    %272 = vmatprep.subr.bf16.mxu0 0
    %273 = vmatpush2.bf16.msra.mxu0 0
    %274 = vmatprep.mubr.bf16.mxu0 0
    %275 = vmatmul.mubr.bf16.gmra.mxu0 %v189
    %v276 = vpop.f32.mrf.mxu0
    %v277 = vadd.f32 %v193, %v276
    %v278 = vpop.f32.mrf.mxu0
    %v279 = vpop.f32.mrf.mxu0
    %v280 = vpop.f32.mrf.mxu0
    %281 = vdwg.mxu0
    %v282 = vmul.f32 %v277, 0.5
    %v283 = vmul.f32 %v282, 1.442695
    %v284 = vpow.pop %v283
    %286 = vrot.lane.b32.xlu0 %v284, 96
    %v287 = vpop.permute.xlu0 %286
    %v289 = vmul.f32 %v69, %v287
    %v290 = vadd.f32 %v289, %v277
    %v291 = vpack.c.bf16 %v290, %v290
    %v292 = vlaneseq
    %v293 = vshrl.u32 %v292, 7
    %v294 = vsub.s32 2, %v293
    %v295 = vrot.slane %v114, %v294
    %v300 = vunpack.c.l.b16 %v94
    %v301 = vunpack.c.l.b16 %v95
    %v302 = vunpack.c.l.b16 %v96
    %v303 = vunpack.c.l.b16 %v97
    %v304 = vpack.c.b16 %v301, %v300
    %v305 = vpack.c.b16 %v303, %v302
    %vm308 = vcmask 261120
    %v310 = vsel %vm308, %v291, 0
    %312 = vmatprep.subr.bf16.mxu0 0
    %313 = vmatpush1.bf16.msra.mxu0 0
    %314 = vmatprep.subr.bf16.mxu0 0
    %315 = vmatpush1.bf16.msra.mxu0 0
    %316 = vmatprep.subr.bf16.mxu0 0
    %317 = vmatpush1.bf16.msra.mxu0 0
    %318 = vmatprep.subr.bf16.mxu0 0
    %319 = vmatpush1.bf16.msra.mxu0 0
    %320 = vmatprep.subr.bf16.mxu0 0
    %321 = vmatpush1.bf16.msra.mxu0 0
    %322 = vmatprep.subr.bf16.mxu0 0
    %323 = vmatpush1.bf16.msra.mxu0 0
    %324 = vmatprep.subr.bf16.mxu0 0
    %325 = vmatpush1.bf16.msra.mxu0 %v305
    %326 = vmatprep.subr.bf16.mxu0 0
    %327 = vmatpush1.bf16.msra.mxu0 %v304
    %328 = vmatprep.subr.bf16.mxu0 0
    %329 = vmatpush2.bf16.msra.mxu0 0
    %330 = vmatprep.subr.bf16.mxu0 0
    %331 = vmatpush2.bf16.msra.mxu0 0
    %332 = vmatprep.subr.bf16.mxu0 0
    %333 = vmatpush2.bf16.msra.mxu0 0
    %334 = vmatprep.subr.bf16.mxu0 0
    %335 = vmatpush2.bf16.msra.mxu0 0
    %336 = vmatprep.subr.bf16.mxu0 0
    %337 = vmatpush2.bf16.msra.mxu0 0
    %338 = vmatprep.subr.bf16.mxu0 0
    %339 = vmatpush2.bf16.msra.mxu0 0
    %340 = vmatprep.subr.bf16.mxu0 0
    %341 = vmatpush2.bf16.msra.mxu0 0
    %342 = vmatprep.subr.bf16.mxu0 0
    %343 = vmatpush2.bf16.msra.mxu0 0
    %344 = vmatprep.mubr.bf16.mxu0 0
    %345 = vmatmul.mubr.bf16.gmra.mxu0 %v310
    %v346 = vpop.f32.mrf.mxu0
    %v347 = vadd.f32 %v295, %v346
    %v348 = vpop.f32.mrf.mxu0
    %v349 = vpop.f32.mrf.mxu0
    %v350 = vpop.f32.mrf.mxu0
    %351 = vdwg.mxu0
    %v352 = vmax.f32 %v347, 0.0
    %v353 = vpack.c.bf16 %v352, %v352
    %v354 = vlaneseq
    %v355 = vshrl.u32 %v354, 7
    %v356 = vsub.s32 3, %v355
    %v357 = vrot.slane %v114, %v356
    %v374 = vunpack.c.l.b16 %v98
    %v375 = vunpack.c.l.b16 %v99
    %v376 = vunpack.c.l.b16 %v100
    %v377 = vunpack.c.l.b16 %v101
    %v378 = vunpack.c.l.b16 %v102
    %v379 = vunpack.c.l.b16 %v103
    %v380 = vunpack.c.l.b16 %v104
    %v381 = vunpack.c.l.b16 %v105
    %v382 = vunpack.c.l.b16 %v106
    %v383 = vunpack.c.l.b16 %v107
    %v384 = vunpack.c.l.b16 %v108
    %v385 = vunpack.c.l.b16 %v109
    %v386 = vunpack.c.l.b16 %v110
    %v387 = vunpack.c.l.b16 %v111
    %v388 = vunpack.c.l.b16 %v112
    %v389 = vunpack.c.l.b16 %v113
    %v390 = vpack.c.b16 %v375, %v374
    %v391 = vpack.c.b16 %v377, %v376
    %v392 = vpack.c.b16 %v379, %v378
    %v393 = vpack.c.b16 %v381, %v380
    %v394 = vpack.c.b16 %v383, %v382
    %v395 = vpack.c.b16 %v385, %v384
    %v396 = vpack.c.b16 %v387, %v386
    %v397 = vpack.c.b16 %v389, %v388
    %406 = vmatprep.subr.bf16.mxu0 0
    %407 = vmatpush1.bf16.msra.mxu0 %v397
    %408 = vmatprep.subr.bf16.mxu0 0
    %409 = vmatpush1.bf16.msra.mxu0 %v396
    %410 = vmatprep.subr.bf16.mxu0 0
    %411 = vmatpush1.bf16.msra.mxu0 %v395
    %412 = vmatprep.subr.bf16.mxu0 0
    %413 = vmatpush1.bf16.msra.mxu0 %v394
    %414 = vmatprep.subr.bf16.mxu0 0
    %415 = vmatpush1.bf16.msra.mxu0 %v393
    %416 = vmatprep.subr.bf16.mxu0 0
    %417 = vmatpush1.bf16.msra.mxu0 %v392
    %418 = vmatprep.subr.bf16.mxu0 0
    %419 = vmatpush1.bf16.msra.mxu0 %v391
    %420 = vmatprep.subr.bf16.mxu0 0
    %421 = vmatpush1.bf16.msra.mxu0 %v390
    %422 = vmatprep.subr.bf16.mxu0 0
    %423 = vmatpush2.bf16.msra.mxu0 0
    %424 = vmatprep.subr.bf16.mxu0 0
    %425 = vmatpush2.bf16.msra.mxu0 0
    %426 = vmatprep.subr.bf16.mxu0 0
    %427 = vmatpush2.bf16.msra.mxu0 0
    %428 = vmatprep.subr.bf16.mxu0 0
    %429 = vmatpush2.bf16.msra.mxu0 0
    %430 = vmatprep.subr.bf16.mxu0 0
    %431 = vmatpush2.bf16.msra.mxu0 0
    %432 = vmatprep.subr.bf16.mxu0 0
    %433 = vmatpush2.bf16.msra.mxu0 0
    %434 = vmatprep.subr.bf16.mxu0 0
    %435 = vmatpush2.bf16.msra.mxu0 0
    %436 = vmatprep.subr.bf16.mxu0 0
    %437 = vmatpush2.bf16.msra.mxu0 0
    %438 = vmatprep.mubr.bf16.mxu0 0
    %439 = vmatmul.mubr.bf16.gmra.mxu0 %v353
    %v440 = vpop.f32.mrf.mxu0
    %v441 = vadd.f32 %v357, %v440
    %v442 = vpop.f32.mrf.mxu0
    %v443 = vpop.f32.mrf.mxu0
    %v444 = vpop.f32.mrf.mxu0
    %445 = vdwg.mxu0
    %v446 = vand.u32 2147483647, %v441
    %v447 = vsub.f32 0.0, %v446
    %v448 = vmul.f32 %v447, 1.442695
    %v449 = vpow.pop %v448
    %v450 = vadd.f32 %v449, 1.0
    %v451 = vrcp.pop %v450
    %vm452 = vcmp.ge.f32.partialorder %v441, 0.0
    %v453 = vsub.f32 1.0, %v451
    %v454 = vsel %vm452, %v451, %v453
    %456 = vrot.lane.b32.xlu0 %v277, 64
    %v457 = vpop.permute.xlu0 %456
    %v459 = vsel %vm144, %v454, %v457
    %460 = vst [vmem:[#allocation10] sm:$0xff] %v459
    // Predicated region
    $region34: #{tpu_custom_call.1} parent=1 // pred_check
      _
    $region35: #{tpu_custom_call.1} parent=1 // pred_check_branch
      %462 = sbr.rel (0) target = $region37
    $region36: #{tpu_custom_call.1} parent=1 // pred_region
      %s464 = ssub.s32 128, 128
      %465 = vsyncadd [#allocation4], %s464
      %s467 = sshll.u32 [#allocation10], 4
      %s468 = int_to_ptr.vmem [resolvable:$true] %s467
      %470 = dma.vmem_to_hbm [thread:$0]  %s468, 128, %s4, [#allocation4]
    $region37: #{tpu_custom_call.1} parent=1 // pred_fallthru
      _
    // Predicated region
    $region38: #{tpu_custom_call.1} parent=1 // pred_check
      _
    $region39: #{tpu_custom_call.1} parent=1 // pred_check_branch
      %472 = sbr.rel (0) target = $region41
    $region40: #{tpu_custom_call.1} parent=1 // pred_region
      %473 = dma.done [#allocation4], 128
    $region41: #{tpu_custom_call.1} parent=1 // pred_fallthru
      _
    %474 = vsyncpa [#allocation3], 1
    %475 = vsyncpa [#allocation6], 1
    %476 = vsyncpa [#allocation9], 1
    %477 = vsyncpa [#allocation4], 1

</llo_original>
